<compile_context>
chip_gen: v7x
topology: tpu7x:2x2x1
jax: 0.10.0
libtpu: 0.0.40
codegen_flags: <defaults>
</compile_context>

<pallas_src>
import functools

import jax
import jax.numpy as jnp
import numpy as np
from jax import lax
from jax.experimental import pallas as pl
from jax.experimental.pallas import tpu as pltpu


def _round_up(x, m):
    return ((x + m - 1) // m) * m


# ----------------------------------------------------------------------------
# Kernel 1: row-tiled  x @ W + b   (used for the hoisted LSTM input projection)
# ----------------------------------------------------------------------------
def _matmul_bias_kernel(x_ref, w_ref, b_ref, o_ref):
    o_ref[...] = (jnp.dot(x_ref[...], w_ref[...],
                          preferred_element_type=jnp.float32)
                  + b_ref[...]).astype(o_ref.dtype)


def matmul_bias(x, w, b2d, *, tile_rows=256):
    n, k = x.shape
    m = w.shape[1]
    tile = min(tile_rows, _round_up(n, 8))
    n_pad = _round_up(n, tile)
    if n_pad != n:
        x = jnp.pad(x, ((0, n_pad - n), (0, 0)))
    out = pl.pallas_call(
        _matmul_bias_kernel,
        grid=(n_pad // tile,),
        in_specs=[
            pl.BlockSpec((tile, k), lambda i: (i, 0)),
            pl.BlockSpec((k, m), lambda i: (0, 0)),      # resident weights
            pl.BlockSpec((1, m), lambda i: (0, 0)),      # resident bias
        ],
        out_specs=pl.BlockSpec((tile, m), lambda i: (i, 0)),
        out_shape=jax.ShapeDtypeStruct((n_pad, m), jnp.float32),
        compiler_params=pltpu.CompilerParams(
            dimension_semantics=("parallel",)),
    )(x, w, b2d)
    return out[:n]


# ----------------------------------------------------------------------------
# Kernel 2: time-blocked masked LSTM recurrence (only h @ W_hh per step).
# Grid = (T_run // TT,), sequential.  h/c persist in VMEM scratch; final (h, c)
# is written only on the last grid step.
# ----------------------------------------------------------------------------
def _lstm_kernel(gx_ref, whh_ref, mask_ref, h0_ref, c0_ref,
                 out_ref, hN_ref, cN_ref, h_sc, c_sc, *, tt, hidden):
    blk = pl.program_id(0)

    @pl.when(blk == 0)
    def _():
        h_sc[...] = h0_ref[...]
        c_sc[...] = c0_ref[...]

    w_hh = whh_ref[...]                                   # [H, 4H] (resident)

    def step(s, carry):
        h, c = carry
        gates = gx_ref[s] + jnp.dot(h, w_hh,
                                    preferred_element_type=jnp.float32)
        i_g = jax.nn.sigmoid(gates[:, 0 * hidden:1 * hidden])
        f_g = jax.nn.sigmoid(gates[:, 1 * hidden:2 * hidden])
        g_g = jnp.tanh(gates[:, 2 * hidden:3 * hidden])
        o_g = jax.nn.sigmoid(gates[:, 3 * hidden:4 * hidden])
        c_new = f_g * c + i_g * g_g
        h_new = o_g * jnp.tanh(c_new)
        valid = mask_ref[s] > 0.5                         # [B, 1] bool
        out_ref[s] = jnp.where(valid, h_new, 0.0).astype(out_ref.dtype)
        return jnp.where(valid, h_new, h), jnp.where(valid, c_new, c)

    h_fin, c_fin = lax.fori_loop(0, tt, step,
                                 (h_sc[...], c_sc[...]), unroll=True)
    h_sc[...] = h_fin
    c_sc[...] = c_fin

    @pl.when(blk == pl.num_programs(0) - 1)
    def _():
        hN_ref[...] = h_fin.astype(hN_ref.dtype)
        cN_ref[...] = c_fin.astype(cN_ref.dtype)


def lstm_packed(gates_x, mask, w_hh_t, h0, c0, *, time_block):
    """gates_x: [T_run, B_p, 4H] (= x@W_ih^T + b), mask: [T_run, B_p, 1] {0,1}."""
    t_run, b_p, g = gates_x.shape
    hid = w_hh_t.shape[0]
    tt = time_block
    assert t_run % tt == 0
    kernel = functools.partial(_lstm_kernel, tt=tt, hidden=hid)
    out, h_n, c_n = pl.pallas_call(
        kernel,
        grid_spec=pltpu.PrefetchScalarGridSpec(
            num_scalar_prefetch=0,
            grid=(t_run // tt,),
            in_specs=[
                pl.BlockSpec((tt, b_p, g), lambda b: (b, 0, 0)),   # gates_x blk
                pl.BlockSpec((hid, g), lambda b: (0, 0)),          # W_hh^T
                pl.BlockSpec((tt, b_p, 1), lambda b: (b, 0, 0)),   # valid mask
                pl.BlockSpec((b_p, hid), lambda b: (0, 0)),        # h0
                pl.BlockSpec((b_p, hid), lambda b: (0, 0)),        # c0
            ],
            out_specs=[
                pl.BlockSpec((tt, b_p, hid), lambda b: (b, 0, 0)),  # per-step h
                pl.BlockSpec((b_p, hid), lambda b: (0, 0)),         # final h
                pl.BlockSpec((b_p, hid), lambda b: (0, 0)),         # final c
            ],
            scratch_shapes=[pltpu.VMEM((b_p, hid), jnp.float32),
                            pltpu.VMEM((b_p, hid), jnp.float32)],
        ),
        out_shape=(jax.ShapeDtypeStruct((t_run, b_p, hid), jnp.float32),
                   jax.ShapeDtypeStruct((b_p, hid), jnp.float32),
                   jax.ShapeDtypeStruct((b_p, hid), jnp.float32)),
        compiler_params=pltpu.CompilerParams(
            dimension_semantics=("arbitrary",)),
    )(gates_x, w_hh_t, mask, h0, c0)
    return out, h_n, c_n


# ----------------------------------------------------------------------------
# Kernel 3: hidden2tag + log_softmax + fused NLL target gather, tiled over rows.
# ----------------------------------------------------------------------------
def _proj_logsoftmax_nll_kernel(x_ref, w_ref, b_ref, tgt_ref, lp_ref, pick_ref):
    logits = (jnp.dot(x_ref[...], w_ref[...],
                      preferred_element_type=jnp.float32) + b_ref[...])
    m = jnp.max(logits, axis=-1, keepdims=True)
    z = logits - m
    lse = jnp.log(jnp.sum(jnp.exp(z), axis=-1, keepdims=True))
    lp = z - lse
    lp_ref[...] = lp.astype(lp_ref.dtype)
    cols = lax.broadcasted_iota(jnp.int32, lp.shape, 1)
    pick = jnp.sum(jnp.where(cols == tgt_ref[...], lp, 0.0),
                   axis=-1, keepdims=True)
    pick_ref[...] = pick.astype(pick_ref.dtype)


def proj_logsoftmax_nll(x, w, b2d, targets, *, tile_rows=256):
    """x: [N, H], w: [H, V], targets: [N, 1] int32 → (log_probs [N,V], picked [N])."""
    n, hid = x.shape
    v = w.shape[1]
    tile = min(tile_rows, _round_up(n, 8))
    n_pad = _round_up(n, tile)
    if n_pad != n:
        x = jnp.pad(x, ((0, n_pad - n), (0, 0)))
        targets = jnp.pad(targets, ((0, n_pad - n), (0, 0)))
    lp, pick = pl.pallas_call(
        _proj_logsoftmax_nll_kernel,
        grid=(n_pad // tile,),
        in_specs=[
            pl.BlockSpec((tile, hid), lambda i: (i, 0)),
            pl.BlockSpec((hid, v), lambda i: (0, 0)),    # resident weights
            pl.BlockSpec((1, v), lambda i: (0, 0)),      # resident bias
            pl.BlockSpec((tile, 1), lambda i: (i, 0)),   # targets
        ],
        out_specs=[
            pl.BlockSpec((tile, v), lambda i: (i, 0)),
            pl.BlockSpec((tile, 1), lambda i: (i, 0)),
        ],
        out_shape=(jax.ShapeDtypeStruct((n_pad, v), jnp.float32),
                   jax.ShapeDtypeStruct((n_pad, 1), jnp.float32)),
        compiler_params=pltpu.CompilerParams(
            dimension_semantics=("parallel",)),
    )(x, w, b2d, targets)
    return lp[:n], pick[:n, 0]


# ----------------------------------------------------------------------------
# Full forward (glue: embedding gather, padding/transposes, loss reduction).
# ----------------------------------------------------------------------------
def language_model_forward(params, input_ids, input_lengths, *,
                           target_ids=None, hidden_state=None,
                           pad_index=0, time_block=8):
    b, t = input_ids.shape
    v, e = params["embedding"].shape
    hid = params["w_hh_t"].shape[0]

    # Host-side lengths (pass numpy/python values to avoid a device sync).
    lengths_np = np.asarray(input_lengths).astype(np.int32)
    max_len = int(lengths_np.max())

    b_p = _round_up(b, 8)                         # pad batch to sublane multiple
    t_run = _round_up(max_len, time_block)        # run only up to max(lengths)

    # Embedding lookup (gather) — glue.
    emb = jnp.take(params["embedding"], input_ids, axis=0)        # [B, T, E]
    t_use = min(t, t_run)
    x = emb[:, :t_use, :].astype(jnp.float32)
    x = jnp.pad(x, ((0, b_p - b), (0, t_run - t_use), (0, 0)))    # [B_p, T_run, E]
    x_tbe = jnp.transpose(x, (1, 0, 2))                           # [T_run, B_p, E]

    # Kernel 1: hoisted input projection for all timesteps at once.
    gx = matmul_bias(x_tbe.reshape(t_run * b_p, e),
                     params["w_ih_t"], params["lstm_bias"])
    gates_x = gx.reshape(t_run, b_p, 4 * hid)

    # {0,1} validity mask reproducing pack/pad_packed_sequence semantics.
    lens_p = jnp.pad(jnp.asarray(lengths_np), (0, b_p - b))
    t_idx = jnp.arange(t_run, dtype=jnp.int32)
    mask = (t_idx[:, None] < lens_p[None, :]).astype(jnp.float32)[:, :, None]

    if hidden_state is None:
        h0 = jnp.zeros((b_p, hid), jnp.float32)
        c0 = jnp.zeros((b_p, hid), jnp.float32)
    else:
        h0 = jnp.pad(hidden_state[0][0].astype(jnp.float32),
                     ((0, b_p - b), (0, 0)))
        c0 = jnp.pad(hidden_state[1][0].astype(jnp.float32),
                     ((0, b_p - b), (0, 0)))

    # Kernel 2: masked LSTM recurrence (h @ W_hh only).
    out_tbh, h_n, c_n = lstm_packed(gates_x, mask, params["w_hh_t"], h0, c0,
                                    time_block=time_block)
    h_n = h_n[:b]
    c_n = c_n[:b]
    seq = jnp.transpose(out_tbh, (1, 0, 2))[:b, :max_len, :]      # [B, Tm, H]

    # Kernel 3: projection + log_softmax + fused NLL gather.
    n_rows = b * max_len
    if target_ids is not None:
        tgt_rows = target_ids[:, :max_len].reshape(n_rows, 1).astype(jnp.int32)
    else:
        tgt_rows = jnp.zeros((n_rows, 1), jnp.int32)
    lp_rows, picked = proj_logsoftmax_nll(
        seq.reshape(n_rows, hid), params["w_out_t"],
        params["b_out"].reshape(1, v), tgt_rows)
    log_probs = lp_rows.reshape(b, max_len, v)

    outputs = {
        "log_softmax": log_probs,
        "last_hidden": (h_n[None, :, :], c_n[None, :, :]),  # [num_layers=1,B,H]
    }
    if target_ids is not None:
        valid = tgt_rows[:, 0] != pad_index
        n_valid = jnp.maximum(jnp.sum(valid.astype(jnp.float32)), 1.0)
        outputs["loss"] = -jnp.sum(jnp.where(valid, picked, 0.0)) / n_valid
    return outputs


# ----------------------------------------------------------------------------
# Pure-JAX reference (lax.scan) used to self-check the Pallas kernels.
# ----------------------------------------------------------------------------
def reference_forward(params, input_ids, input_lengths, target_ids, pad_index):
    v, e = params["embedding"].shape
    hid = params["w_hh_t"].shape[0]
    b, t = input_ids.shape
    lens = jnp.asarray(np.asarray(input_lengths), dtype=jnp.int32)
    emb = jnp.take(params["embedding"], input_ids, axis=0)
    x_tbe = jnp.transpose(emb, (1, 0, 2))

    def step(carry, inp):
        h, c = carry
        x_t, tstep = inp
        gates = x_t @ params["w_ih_t"] + h @ params["w_hh_t"] + params["lstm_bias"]
        i_g = jax.nn.sigmoid(gates[:, 0 * hid:1 * hid])
        f_g = jax.nn.sigmoid(gates[:, 1 * hid:2 * hid])
        g_g = jnp.tanh(gates[:, 2 * hid:3 * hid])
        o_g = jax.nn.sigmoid(gates[:, 3 * hid:4 * hid])
        c_new = f_g * c + i_g * g_g
        h_new = o_g * jnp.tanh(c_new)
        valid = lens.reshape(b, 1) > tstep
        return ((jnp.where(valid, h_new, h), jnp.where(valid, c_new, c)),
                jnp.where(valid, h_new, 0.0))

    (h_n, c_n), outs = lax.scan(
        step, (jnp.zeros((b, hid)), jnp.zeros((b, hid))),
        (x_tbe, jnp.arange(t, dtype=jnp.int32)))
    max_len = int(np.asarray(input_lengths).max())
    seq = jnp.transpose(outs, (1, 0, 2))[:, :max_len, :]
    logits = seq @ params["w_out_t"] + params["b_out"]
    log_probs = jax.nn.log_softmax(logits, axis=-1)
    tgt = target_ids[:, :max_len].reshape(-1)
    lp = log_probs.reshape(-1, v)
    valid = tgt != pad_index
    picked = jnp.take_along_axis(lp, tgt[:, None], axis=-1)[:, 0]
    loss = -jnp.sum(jnp.where(valid, picked, 0.0)) / jnp.maximum(
        jnp.sum(valid.astype(jnp.float32)), 1.0)
    return log_probs, h_n, c_n, loss


# ----------------------------------------------------------------------------
def init_params(key, vocab_size, embedding_size, hidden_size, pad_index):
    k = jax.random.split(key, 8)
    s = 1.0 / np.sqrt(hidden_size)
    emb = jax.random.normal(k[0], (vocab_size, embedding_size), jnp.float32)
    emb = emb.at[pad_index].set(0.0)                      # padding_idx row = 0
    w_ih = jax.random.uniform(k[1], (4 * hidden_size, embedding_size),
                              jnp.float32, -s, s)
    w_hh = jax.random.uniform(k[2], (4 * hidden_size, hidden_size),
                              jnp.float32, -s, s)
    b_ih = jax.random.uniform(k[3], (4 * hidden_size,), jnp.float32, -s, s)
    b_hh = jax.random.uniform(k[4], (4 * hidden_size,), jnp.float32, -s, s)
    w_out = jax.random.uniform(k[5], (vocab_size, hidden_size),
                               jnp.float32, -s, s)
    b_out = jax.random.uniform(k[6], (vocab_size,), jnp.float32, -s, s)
    return {
        "embedding": emb,
        "w_ih_t": w_ih.T,                                 # [E, 4H]
        "w_hh_t": w_hh.T,                                 # [H, 4H]
        "lstm_bias": (b_ih + b_hh).reshape(1, -1),        # [1, 4H]
        "w_out_t": w_out.T,                               # [H, V]
        "b_out": b_out,                                   # [V]
    }


if __name__ == "__main__":
    VOCAB, EMB, HID, PAD = 32, 32, 32, 0
    B, T = 2, 8

    key = jax.random.PRNGKey(0)
    pkey, ikey, tkey = jax.random.split(key, 3)
    params = init_params(pkey, VOCAB, EMB, HID, PAD)

    lengths = np.array([T, T - 3], dtype=np.int32)        # host-side lengths
    pos = jnp.arange(T)[None, :]
    pad_mask = pos < jnp.asarray(lengths)[:, None]

    input_ids = jax.random.randint(ikey, (B, T), 1, VOCAB, dtype=jnp.int32)
    input_ids = jnp.where(pad_mask, input_ids, PAD)
    target_ids = jax.random.randint(tkey, (B, T), 1, VOCAB, dtype=jnp.int32)
    target_ids = jnp.where(pad_mask, target_ids, PAD)

    out = language_model_forward(params, input_ids, lengths,
                                 target_ids=target_ids, pad_index=PAD,
                                 time_block=8)
    jax.block_until_ready(out["log_softmax"])
    jax.block_until_ready(out["loss"])

    # Self-check against pure-JAX reference.
    ref_lp, ref_h, ref_c, ref_loss = reference_forward(
        params, input_ids, lengths, target_ids, PAD)
    np.testing.assert_allclose(np.asarray(out["log_softmax"]),
                               np.asarray(ref_lp), rtol=1e-4, atol=1e-4)
    np.testing.assert_allclose(np.asarray(out["last_hidden"][0][0]),
                               np.asarray(ref_h), rtol=1e-4, atol=1e-4)
    np.testing.assert_allclose(np.asarray(out["last_hidden"][1][0]),
                               np.asarray(ref_c), rtol=1e-4, atol=1e-4)
    np.testing.assert_allclose(np.asarray(out["loss"]),
                               np.asarray(ref_loss), rtol=1e-4, atol=1e-4)

    print("KERNEL_OK")
</pallas_src>

<mosaic_0001>
module attributes {stable_mosaic.version = 11 : i64} {
  func.func @_matmul_bias_kernel(%arg0: i32, %arg1: memref<64x32xf32, #tpu.memory_space<vmem>>, %arg2: memref<32x128xf32, #tpu.memory_space<vmem>>, %arg3: memref<1x128xf32, #tpu.memory_space<vmem>>, %arg4: memref<64x128xf32, #tpu.memory_space<vmem>>) attributes {dimension_semantics = [#tpu.dimension_semantics<parallel>], iteration_bounds = array<i64: 1>, scalar_prefetch = 0 : i64, scratch_operands = 0 : i64, tpu.core_type = #tpu.core_type<tc>, window_params = [{transform_indices = @transform_0, window_bounds = array<i64: 64, 32>}, {pipeline_mode = #tpu.pipeline_mode<synchronous>, transform_indices = @transform_1, window_bounds = array<i64: 32, 128>}, {pipeline_mode = #tpu.pipeline_mode<synchronous>, transform_indices = @transform_2, window_bounds = array<i64: 1, 128>}, {transform_indices = @transform_3, window_bounds = array<i64: 64, 128>}]} {
    %c0 = arith.constant 0 : index
    %c0_0 = arith.constant 0 : index
    %0 = vector.load %arg1[%c0, %c0_0] : memref<64x32xf32, #tpu.memory_space<vmem>>, vector<64x32xf32>
    %c0_1 = arith.constant 0 : index
    %c0_2 = arith.constant 0 : index
    %1 = vector.load %arg2[%c0_1, %c0_2] : memref<32x128xf32, #tpu.memory_space<vmem>>, vector<32x128xf32>
    %cst = arith.constant dense<0.000000e+00> : vector<64x128xf32>
    %2 = tpu.matmul %0, %1, %cst {dimension_numbers = #tpu.dot_dimension_numbers<[1], [0], [0], [1], [0, 0, 1, 1], [], []>} : vector<64x32xf32>, vector<32x128xf32>, vector<64x128xf32> -> vector<64x128xf32>
    %c0_3 = arith.constant 0 : index
    %c0_4 = arith.constant 0 : index
    %3 = vector.load %arg3[%c0_3, %c0_4] : memref<1x128xf32, #tpu.memory_space<vmem>>, vector<1x128xf32>
    %4 = vector.broadcast %3 : vector<1x128xf32> to vector<64x128xf32>
    %5 = arith.addf %2, %4 : vector<64x128xf32>
    %c0_5 = arith.constant 0 : index
    %c0_6 = arith.constant 0 : index
    %6 = vector.load %arg4[%c0_5, %c0_6] : memref<64x128xf32, #tpu.memory_space<vmem>>, vector<64x128xf32>
    tpu.vector_store %arg4[%c0_5, %c0_6], %5 {strides = array<i32>} : memref<64x128xf32, #tpu.memory_space<vmem>>, vector<64x128xf32>,
    return
  }
  func.func @transform_0(%arg0: i32) -> (i32, i32) {
    %c0_i32 = arith.constant 0 : i32
    %c0_i32_0 = arith.constant 0 : i32
    return %arg0, %c0_i32 : i32, i32
  }
  func.func @transform_1(%arg0: i32) -> (i32, i32) {
    %c0_i32 = arith.constant 0 : i32
    %c0_i32_0 = arith.constant 0 : i32
    %c0_i32_1 = arith.constant 0 : i32
    return %c0_i32, %c0_i32_0 : i32, i32
  }
  func.func @transform_2(%arg0: i32) -> (i32, i32) {
    %c0_i32 = arith.constant 0 : i32
    %c0_i32_0 = arith.constant 0 : i32
    %c0_i32_1 = arith.constant 0 : i32
    return %c0_i32, %c0_i32_0 : i32, i32
  }
  func.func @transform_3(%arg0: i32) -> (i32, i32) {
    %c0_i32 = arith.constant 0 : i32
    %c0_i32_0 = arith.constant 0 : i32
    return %arg0, %c0_i32 : i32, i32
  }
}

</mosaic_0001>

<llo_original>
// kernel: tpu_custom_call.1
$region0: #{tpu_custom_call.1}
  #allocation0 [shape = 'u32[]', space=smem, size = 0x4, offset = 0x4, fixed_abs, tag = 'smem constant byte address 0x4 - core index']
  #allocation1 [shape = 'u32[144,128]{1,0:T(1,128)}', space=vmem, size = 0x12000, scoped, tag = 'internal scratch']
  %s0 = inlined_call_operand.vmem [shape: f32[64,32], index: 0, kind: input, shape index: {}]
  %s1 = inlined_call_operand.vmem [shape: f32[32,128], index: 1, kind: input, shape index: {}]
  %s2 = inlined_call_operand.vmem [shape: f32[1,128], index: 2, kind: input, shape index: {}]
  %s3 = inlined_call_operand.hbm [shape: f32[64,128], index: 3, kind: output, shape index: {}]
  %s4 = sld [smem:[#allocation0]]
  $region22: #{tpu_custom_call.1} parent=0
    _
  %s6 = ssub.s32 1, %s4
  %s7 = scalar_select 0, %s6, %s4
  $region1: #{tpu_custom_call.1} parent=0
    #allocation2 [shape = 'u8[32768]{0}', space=vmem, size = 0x8000, scoped, tag = 'output window, operand 0, single buffered']
    #allocation3 [shape = 's32[1]{0}', space=sflag, size = 0x4, scoped, tag = 'scoped memory for tpu_custom_call.1']
    %8 = vsyncpa [#allocation3], 0
    // Predicated region
    $region2: #{tpu_custom_call.1} parent=1 // pred_check
      _
    $region3: #{tpu_custom_call.1} parent=1 // pred_check_branch
      %10 = sbr.rel (0) target = $region5
    $region4: #{tpu_custom_call.1} parent=1 // pred_region
      _
    $region5: #{tpu_custom_call.1} parent=1 // pred_fallthru
      _
    // Predicated region
    $region6: #{tpu_custom_call.1} parent=1 // pred_check
      _
    $region7: #{tpu_custom_call.1} parent=1 // pred_check_branch
      %12 = sbr.rel (0) target = $region9
    $region8: #{tpu_custom_call.1} parent=1 // pred_region
      _
    $region9: #{tpu_custom_call.1} parent=1 // pred_fallthru
      _
    // Predicated region
    $region10: #{tpu_custom_call.1} parent=1 // pred_check
      _
    $region11: #{tpu_custom_call.1} parent=1 // pred_check_branch
      %14 = sbr.rel (0) target = $region13
    $region12: #{tpu_custom_call.1} parent=1 // pred_region
      _
    $region13: #{tpu_custom_call.1} parent=1 // pred_fallthru
      _
    %v15 = vld [vmem:[%s0] sm:$0xff]
    %v16 = vld [vmem:[%s0 + $0x8] sm:$0xff]
    %v17 = vld [vmem:[%s0 + $0x10] sm:$0xff]
    %v18 = vld [vmem:[%s0 + $0x18] sm:$0xff]
    %v19 = vld [vmem:[%s0 + $0x20] sm:$0xff]
    %v20 = vld [vmem:[%s0 + $0x28] sm:$0xff]
    %v21 = vld [vmem:[%s0 + $0x30] sm:$0xff]
    %v22 = vld [vmem:[%s0 + $0x38] sm:$0xff]
    %v23 = vld [vmem:[%s1] sm:$0xff]
    %v24 = vld [vmem:[%s1 + $0x8] sm:$0xff]
    %v25 = vld [vmem:[%s1 + $0x10] sm:$0xff]
    %v26 = vld [vmem:[%s1 + $0x18] sm:$0xff]
    %v27 = vld [vmem:[%s2] sm:$0x1]
    %v29 = vlaneseq
    %v30 = vshrl.u32 %v29, 7
    %v31 = vsub.s32 0, %v30
    %v32 = vrot.slane %v27, %v31
    %vm34 = vcmask 261120
    %v36 = vsel %vm34, %v15, 0
    %v39 = vsel %vm34, %v16, 0
    %v42 = vsel %vm34, %v17, 0
    %v45 = vsel %vm34, %v18, 0
    %v48 = vsel %vm34, %v19, 0
    %v51 = vsel %vm34, %v20, 0
    %v54 = vsel %vm34, %v21, 0
    %v57 = vsel %vm34, %v22, 0
    %59 = vmatprep.subr.mxu0 0.0
    %60 = vmatpush1.msra.mxu0 %v23
    %61 = vmatprep.subr.mxu0 0.0
    %62 = vmatpush1.msra.mxu0 %v24
    %63 = vmatprep.subr.mxu0 0.0
    %64 = vmatpush1.msra.mxu0 %v25
    %65 = vmatprep.subr.mxu0 0.0
    %66 = vmatpush1.msra.mxu0 %v26
    %67 = vmatprep.subr.mxu0 0.0
    %68 = vmatpush1.msra.mxu0 0.0
    %69 = vmatprep.subr.mxu0 0.0
    %70 = vmatpush1.msra.mxu0 0.0
    %71 = vmatprep.subr.mxu0 0.0
    %72 = vmatpush1.msra.mxu0 0.0
    %73 = vmatprep.subr.mxu0 0.0
    %74 = vmatpush1.msra.mxu0 0.0
    %75 = vmatprep.subr.mxu0 0.0
    %76 = vmatpush1.msra.mxu0 0.0
    %77 = vmatprep.subr.mxu0 0.0
    %78 = vmatpush1.msra.mxu0 0.0
    %79 = vmatprep.subr.mxu0 0.0
    %80 = vmatpush1.msra.mxu0 0.0
    %81 = vmatprep.subr.mxu0 0.0
    %82 = vmatpush1.msra.mxu0 0.0
    %83 = vmatprep.subr.mxu0 0.0
    %84 = vmatpush1.msra.mxu0 0.0
    %85 = vmatprep.subr.mxu0 0.0
    %86 = vmatpush1.msra.mxu0 0.0
    %87 = vmatprep.subr.mxu0 0.0
    %88 = vmatpush1.msra.mxu0 0.0
    %89 = vmatprep.subr.mxu0 0.0
    %90 = vmatpush1.msra.mxu0 0.0
    %91 = vmatprep.subr.mxu0 0.0
    %92 = vmatpush1.msra.mxu0 0.0
    %93 = vmatprep.subr.mxu0 0.0
    %94 = vmatpush1.msra.mxu0 0.0
    %95 = vmatprep.subr.mxu0 0.0
    %96 = vmatpush1.msra.mxu0 0.0
    %97 = vmatprep.subr.mxu0 0.0
    %98 = vmatpush1.msra.mxu0 0.0
    %99 = vmatprep.subr.mxu0 0.0
    %100 = vmatpush1.msra.mxu0 0.0
    %101 = vmatprep.subr.mxu0 0.0
    %102 = vmatpush1.msra.mxu0 0.0
    %103 = vmatprep.subr.mxu0 0.0
    %104 = vmatpush1.msra.mxu0 0.0
    %105 = vmatprep.subr.mxu0 0.0
    %106 = vmatpush1.msra.mxu0 0.0
    %107 = vmatprep.subr.mxu0 0.0
    %108 = vmatpush1.msra.mxu0 0.0
    %109 = vmatprep.subr.mxu0 0.0
    %110 = vmatpush1.msra.mxu0 0.0
    %111 = vmatprep.subr.mxu0 0.0
    %112 = vmatpush1.msra.mxu0 0.0
    %113 = vmatprep.subr.mxu0 0.0
    %114 = vmatpush1.msra.mxu0 0.0
    %115 = vmatprep.subr.mxu0 0.0
    %116 = vmatpush1.msra.mxu0 0.0
    %117 = vmatprep.subr.mxu0 0.0
    %118 = vmatpush1.msra.mxu0 0.0
    %119 = vmatprep.subr.mxu0 0.0
    %120 = vmatpush1.msra.mxu0 0.0
    %121 = vmatprep.subr.mxu0 0.0
    %122 = vmatpush1.msra.mxu0 0.0
    %123 = vmatprep.mubr.f32.mxu0 0.0
    %124 = vmatmul.mubr.f32.gmra.mrb[0].mxu0 %v36
    %v125 = vpop.f32.mrb[0].mxu0
    %v126 = vadd.f32 %v32, %v125
    %v127 = vpop.f32.mrb[0].mxu0
    %128 = vmatprep.mubr.f32.mxu0 0.0
    %129 = vmatmul.mubr.f32.gmra.mrb[0].mxu0 %v39
    %v130 = vpop.f32.mrb[0].mxu0
    %v131 = vadd.f32 %v32, %v130
    %v132 = vpop.f32.mrb[0].mxu0
    %133 = vmatprep.mubr.f32.mxu0 0.0
    %134 = vmatmul.mubr.f32.gmra.mrb[0].mxu0 %v42
    %v135 = vpop.f32.mrb[0].mxu0
    %v136 = vadd.f32 %v32, %v135
    %v137 = vpop.f32.mrb[0].mxu0
    %138 = vmatprep.mubr.f32.mxu0 0.0
    %139 = vmatmul.mubr.f32.gmra.mrb[0].mxu0 %v45
    %v140 = vpop.f32.mrb[0].mxu0
    %v141 = vadd.f32 %v32, %v140
    %v142 = vpop.f32.mrb[0].mxu0
    %143 = vmatprep.mubr.f32.mxu0 0.0
    %144 = vmatmul.mubr.f32.gmra.mrb[0].mxu0 %v48
    %v145 = vpop.f32.mrb[0].mxu0
    %v146 = vadd.f32 %v32, %v145
    %v147 = vpop.f32.mrb[0].mxu0
    %148 = vmatprep.mubr.f32.mxu0 0.0
    %149 = vmatmul.mubr.f32.gmra.mrb[0].mxu0 %v51
    %v150 = vpop.f32.mrb[0].mxu0
    %v151 = vadd.f32 %v32, %v150
    %v152 = vpop.f32.mrb[0].mxu0
    %153 = vmatprep.mubr.f32.mxu0 0.0
    %154 = vmatmul.mubr.f32.gmra.mrb[0].mxu0 %v54
    %v155 = vpop.f32.mrb[0].mxu0
    %v156 = vadd.f32 %v32, %v155
    %v157 = vpop.f32.mrb[0].mxu0
    %158 = vmatprep.mubr.f32.mxu0 0.0
    %159 = vmatmul.mubr.f32.gmra.mrb[0].mxu0 %v57
    %v160 = vpop.f32.mrb[0].mxu0
    %v161 = vadd.f32 %v32, %v160
    %v162 = vpop.f32.mrb[0].mxu0
    %163 = vdwg.mxu0
    %164 = vst [vmem:[#allocation2] sm:$0xff] %v126
    %165 = vst [vmem:[#allocation2 + $0x8] sm:$0xff] %v131
    %166 = vst [vmem:[#allocation2 + $0x10] sm:$0xff] %v136
    %167 = vst [vmem:[#allocation2 + $0x18] sm:$0xff] %v141
    %168 = vst [vmem:[#allocation2 + $0x20] sm:$0xff] %v146
    %169 = vst [vmem:[#allocation2 + $0x28] sm:$0xff] %v151
    %170 = vst [vmem:[#allocation2 + $0x30] sm:$0xff] %v156
    %171 = vst [vmem:[#allocation2 + $0x38] sm:$0xff] %v161
    // Predicated region
    $region14: #{tpu_custom_call.1} parent=1 // pred_check
      _
    $region15: #{tpu_custom_call.1} parent=1 // pred_check_branch
      %173 = sbr.rel (0) target = $region17
    $region16: #{tpu_custom_call.1} parent=1 // pred_region
      %s175 = ssub.s32 1024, 1024
      %176 = vsyncadd [#allocation3], %s175
      %s177 = sshll.u32 [#allocation2], 4
      %s178 = int_to_ptr.vmem [resolvable:$true] %s177
      %183 = dma.vmem_to_hbm [thread:$0]  %s178, 1024, %s3, [#allocation3], 128, 128, 8
    $region17: #{tpu_custom_call.1} parent=1 // pred_fallthru
      _
    // Predicated region
    $region18: #{tpu_custom_call.1} parent=1 // pred_check
      _
    $region19: #{tpu_custom_call.1} parent=1 // pred_check_branch
      %185 = sbr.rel (0) target = $region21
    $region20: #{tpu_custom_call.1} parent=1 // pred_region
      %186 = dma.done [#allocation3], 1024
    $region21: #{tpu_custom_call.1} parent=1 // pred_fallthru
      _
    %187 = vsyncpa [#allocation3], 1

</llo_original>
